<compile_context>
chip_gen: v7x
topology: tpu7x:2x2x1
jax: 0.10.0
libtpu: 0.0.40
codegen_flags: <defaults>
</compile_context>

<pallas_src>
import math

import jax
import jax.numpy as jnp
from jax.experimental import pallas as pl
from jax.experimental.pallas import tpu as pltpu


def _posenc_add_kernel(x_ref, pe_ref, o_ref):
    # x_ref, pe_ref, o_ref: (ts, B*D) lane-dense tiles.
    o_ref[...] = x_ref[...] + pe_ref[...]


def make_positional_encoding(d_model, max_len=1000):
    """Sinusoidal PE buffer, built once (mirrors register_buffer).

    Returns (pe3d, pe2d): pe3d is the PyTorch-shaped (max_len, 1, d_model)
    buffer, pe2d is the same data as (max_len, d_model).
    """
    assert d_model % 2 == 0, "PositionalEncoding requires an even d_model"
    position = jnp.arange(max_len, dtype=jnp.float32)[:, None]              # (L, 1)
    div_term = jnp.exp(jnp.arange(0, d_model, 2, dtype=jnp.float32)
                       * (-math.log(10000.0) / d_model))                    # (D/2,)
    pe = jnp.zeros((max_len, d_model), jnp.float32)
    pe = pe.at[:, 0::2].set(jnp.sin(position * div_term))
    pe = pe.at[:, 1::2].set(jnp.cos(position * div_term))
    return pe[:, None, :], pe


def tile_positional_encoding(pe2d, batch):
    """Pre-tile the PE buffer across the batch axis once: (L, D) -> (L, B*D).

    Row-major flatten of x's (B, D) minor dims is [x[s,0,:], ..., x[s,B-1,:]],
    so the matching flat PE row is the PE row repeated B times.
    """
    return jnp.tile(pe2d, (1, batch))


def _round_up(x, m):
    return ((x + m - 1) // m) * m


def _choose_tile_rows(S, row_bytes, *, target_dma_bytes=1 << 20,
                      vmem_budget_bytes=24 << 20):
    """Pick sequence-tile rows from a VMEM byte budget, not a fixed row count.

    Double-buffered working set ~= 2 buffers x (x-in + pe-in + out)
    = 6 * ts * row_bytes. The 24 MiB default keeps the pipeline well inside
    v7x's 64 MiB VMEM (and v5e's small scoped default) with ~1 MiB block DMAs.
    """
    max_by_vmem = max(8, vmem_budget_bytes // (6 * row_bytes))
    by_dma = max(8, target_dma_bytes // row_bytes)
    ts = min(S, min(max_by_vmem, by_dma))
    if S >= 16:
        # keep >= 2 grid steps so both v7x TensorCores get work
        ts = min(ts, _round_up(pl.cdiv(S, 2), 8))
    # (8,128) rule: block rows a multiple of 8 (partial trailing block is fine)
    ts = max(8, (ts // 8) * 8)
    return ts


def positional_encoding_forward(x, pe_flat, *, vmem_budget_bytes=24 << 20,
                                donate_x=False):
    """x: (S, B, D); pe_flat: (max_len, B*D) pre-tiled buffer. Returns x + pe[:S]."""
    S, B, D = x.shape
    BD = B * D
    assert pe_flat.ndim == 2 and pe_flat.shape[1] == BD and pe_flat.shape[0] >= S

    x2 = x.reshape(S, BD)                            # contiguous, free reshape
    row_bytes = BD * jnp.dtype(x.dtype).itemsize
    ts = _choose_tile_rows(S, row_bytes, vmem_budget_bytes=vmem_budget_bytes)
    grid = (pl.cdiv(S, ts),)
    # headroom over the double-buffered working set, clamped to sane bounds
    vmem_limit = int(min(64 << 20, max(4 << 20, 8 * ts * row_bytes)))

    out2 = pl.pallas_call(
        _posenc_add_kernel,
        out_shape=jax.ShapeDtypeStruct((S, BD), x.dtype),
        grid_spec=pltpu.PrefetchScalarGridSpec(
            num_scalar_prefetch=0,
            grid=grid,
            in_specs=[
                pl.BlockSpec((ts, BD), lambda i: (i, 0)),    # x tile
                pl.BlockSpec((ts, BD), lambda i: (i, 0)),    # pe tile (full buffer;
                                                             # only first blocks touched)
            ],
            out_specs=pl.BlockSpec((ts, BD), lambda i: (i, 0)),
        ),
        compiler_params=pltpu.CompilerParams(
            dimension_semantics=("parallel",),               # seq tiles independent
            vmem_limit_bytes=vmem_limit),
        input_output_aliases=({0: 0} if donate_x else {}),
    )(x2, pe_flat)
    return out2.reshape(S, B, D)


if __name__ == "__main__":
    d_model, max_len = 32, 1000
    seq_len, batch = 8, 4

    key = jax.random.PRNGKey(0)
    x = jax.random.normal(key, (seq_len, batch, d_model), jnp.float32)

    # Built once at "__init__" time (register_buffer); pe_flat is the lane-dense,
    # batch-tiled copy that the kernel streams.
    pe3d, pe2d = make_positional_encoding(d_model, max_len)
    pe_flat = tile_positional_encoding(pe2d, batch)          # (max_len, B*D)

    out = positional_encoding_forward(x, pe_flat)
    out = jax.block_until_ready(out)

    # correctness check vs pure-JAX reference (same formula / same buffer)
    ref = x + pe3d[:seq_len]
    assert out.shape == (seq_len, batch, d_model), out.shape
    assert jnp.allclose(out, ref, atol=1e-6, rtol=1e-6), "mismatch vs reference"
    print("KERNEL_OK")
</pallas_src>

<mosaic_0001>
module attributes {stable_mosaic.version = 11 : i64} {
  func.func @_posenc_add_kernel(%arg0: i32, %arg1: memref<8x128xf32, #tpu.memory_space<vmem>>, %arg2: memref<8x128xf32, #tpu.memory_space<vmem>>, %arg3: memref<8x128xf32, #tpu.memory_space<vmem>>) attributes {dimension_semantics = [#tpu.dimension_semantics<parallel>], iteration_bounds = array<i64: 1>, scalar_prefetch = 0 : i64, scratch_operands = 0 : i64, tpu.core_type = #tpu.core_type<tc>, window_params = [{transform_indices = @transform_0, window_bounds = array<i64: 8, 128>}, {transform_indices = @transform_1, window_bounds = array<i64: 8, 128>}, {transform_indices = @transform_2, window_bounds = array<i64: 8, 128>}]} {
    %c0 = arith.constant 0 : index
    %c0_0 = arith.constant 0 : index
    %0 = vector.load %arg1[%c0, %c0_0] : memref<8x128xf32, #tpu.memory_space<vmem>>, vector<8x128xf32>
    %c0_1 = arith.constant 0 : index
    %c0_2 = arith.constant 0 : index
    %1 = vector.load %arg2[%c0_1, %c0_2] : memref<8x128xf32, #tpu.memory_space<vmem>>, vector<8x128xf32>
    %2 = arith.addf %0, %1 : vector<8x128xf32>
    %c0_3 = arith.constant 0 : index
    %c0_4 = arith.constant 0 : index
    %3 = vector.load %arg3[%c0_3, %c0_4] : memref<8x128xf32, #tpu.memory_space<vmem>>, vector<8x128xf32>
    tpu.vector_store %arg3[%c0_3, %c0_4], %2 {strides = array<i32>} : memref<8x128xf32, #tpu.memory_space<vmem>>, vector<8x128xf32>,
    return
  }
  func.func @transform_0(%arg0: i32) -> (i32, i32) {
    %c0_i32 = arith.constant 0 : i32
    %c0_i32_0 = arith.constant 0 : i32
    return %arg0, %c0_i32 : i32, i32
  }
  func.func @transform_1(%arg0: i32) -> (i32, i32) {
    %c0_i32 = arith.constant 0 : i32
    %c0_i32_0 = arith.constant 0 : i32
    return %arg0, %c0_i32 : i32, i32
  }
  func.func @transform_2(%arg0: i32) -> (i32, i32) {
    %c0_i32 = arith.constant 0 : i32
    %c0_i32_0 = arith.constant 0 : i32
    return %arg0, %c0_i32 : i32, i32
  }
}

</mosaic_0001>

<llo_original>
// kernel: tpu_custom_call.1
$region0: #{tpu_custom_call.1}
  #allocation0 [shape = 'u32[]', space=smem, size = 0x4, offset = 0x4, fixed_abs, tag = 'smem constant byte address 0x4 - core index']
  #allocation1 [shape = 'u32[144,128]{1,0:T(1,128)}', space=vmem, size = 0x12000, scoped, tag = 'internal scratch']
  %s0 = inlined_call_operand.hbm [shape: f32[8,128], index: 0, kind: input, shape index: {}]
  %s1 = inlined_call_operand.hbm [shape: f32[1000,128], index: 1, kind: input, shape index: {}]
  %s2 = inlined_call_operand.hbm [shape: f32[8,128], index: 2, kind: output, shape index: {}]
  %s3 = sld [smem:[#allocation0]]
  $region26: #{tpu_custom_call.1} parent=0
    _
  %s5 = ssub.s32 1, %s3
  %s6 = scalar_select 0, %s5, %s3
  $region1: #{tpu_custom_call.1} parent=0
    #allocation2 [shape = 'u8[4096]{0}', space=vmem, size = 0x1000, scoped, tag = 'input window, operand 0, single buffered']
    #allocation3 [shape = 's32[1]{0}', space=sflag, size = 0x4, scoped, tag = 'scoped memory for tpu_custom_call.1']
    #allocation4 [shape = 's32[1]{0}', space=sflag, size = 0x4, scoped, tag = 'scoped memory for tpu_custom_call.1']
    #allocation5 [shape = 'u8[4096]{0}', space=vmem, size = 0x1000, scoped, tag = 'input window, operand 1, single buffered']
    #allocation6 [shape = 's32[1]{0}', space=sflag, size = 0x4, scoped, tag = 'scoped memory for tpu_custom_call.1']
    #allocation7 [shape = 'u8[4096]{0}', space=vmem, size = 0x1000, scoped, tag = 'output window, operand 0, single buffered']
    %7 = vsyncpa [#allocation3], 0
    %8 = vsyncpa [#allocation6], 0
    %9 = vsyncpa [#allocation4], 0
    // Predicated region
    $region2: #{tpu_custom_call.1} parent=1 // pred_check
      _
    $region3: #{tpu_custom_call.1} parent=1 // pred_check_branch
      %11 = sbr.rel (0) target = $region5
    $region4: #{tpu_custom_call.1} parent=1 // pred_region
      %s13 = ssub.s32 128, 128
      %14 = vsyncadd [#allocation3], %s13
      %s16 = sshll.u32 [#allocation2], 4
      %s17 = int_to_ptr.vmem [resolvable:$true] %s16
      %19 = dma.hbm_to_vmem [thread:$0]  %s0, 128, %s17, [#allocation3]
    $region5: #{tpu_custom_call.1} parent=1 // pred_fallthru
      _
    // Predicated region
    $region6: #{tpu_custom_call.1} parent=1 // pred_check
      _
    $region7: #{tpu_custom_call.1} parent=1 // pred_check_branch
      %21 = sbr.rel (0) target = $region9
    $region8: #{tpu_custom_call.1} parent=1 // pred_region
      %s23 = ssub.s32 128, 128
      %24 = vsyncadd [#allocation6], %s23
      %s26 = sshll.u32 [#allocation5], 4
      %s27 = int_to_ptr.vmem [resolvable:$true] %s26
      %29 = dma.hbm_to_vmem [thread:$0]  %s1, 128, %s27, [#allocation6]
    $region9: #{tpu_custom_call.1} parent=1 // pred_fallthru
      _
    // Predicated region
    $region10: #{tpu_custom_call.1} parent=1 // pred_check
      _
    $region11: #{tpu_custom_call.1} parent=1 // pred_check_branch
      %31 = sbr.rel (0) target = $region13
    $region12: #{tpu_custom_call.1} parent=1 // pred_region
      %32 = dma.done [#allocation3], 128
    $region13: #{tpu_custom_call.1} parent=1 // pred_fallthru
      _
    // Predicated region
    $region14: #{tpu_custom_call.1} parent=1 // pred_check
      _
    $region15: #{tpu_custom_call.1} parent=1 // pred_check_branch
      %34 = sbr.rel (0) target = $region17
    $region16: #{tpu_custom_call.1} parent=1 // pred_region
      %35 = dma.done [#allocation6], 128
    $region17: #{tpu_custom_call.1} parent=1 // pred_fallthru
      _
    %v36 = vld [vmem:[#allocation2] sm:$0xff]
    %v37 = vld [vmem:[#allocation5] sm:$0xff]
    %v38 = vadd.f32 %v36, %v37
    %39 = vst [vmem:[#allocation7] sm:$0xff] %v38
    // Predicated region
    $region18: #{tpu_custom_call.1} parent=1 // pred_check
      _
    $region19: #{tpu_custom_call.1} parent=1 // pred_check_branch
      %41 = sbr.rel (0) target = $region21
    $region20: #{tpu_custom_call.1} parent=1 // pred_region
      %s43 = ssub.s32 128, 128
      %44 = vsyncadd [#allocation4], %s43
      %s46 = sshll.u32 [#allocation7], 4
      %s47 = int_to_ptr.vmem [resolvable:$true] %s46
      %49 = dma.vmem_to_hbm [thread:$0]  %s47, 128, %s2, [#allocation4]
    $region21: #{tpu_custom_call.1} parent=1 // pred_fallthru
      _
    // Predicated region
    $region22: #{tpu_custom_call.1} parent=1 // pred_check
      _
    $region23: #{tpu_custom_call.1} parent=1 // pred_check_branch
      %51 = sbr.rel (0) target = $region25
    $region24: #{tpu_custom_call.1} parent=1 // pred_region
      %52 = dma.done [#allocation4], 128
    $region25: #{tpu_custom_call.1} parent=1 // pred_fallthru
      _
    %53 = vsyncpa [#allocation3], 1
    %54 = vsyncpa [#allocation6], 1
    %55 = vsyncpa [#allocation4], 1

</llo_original>
